<compile_context>
chip_gen: v7x
topology: tpu7x:2x2x1
jax: 0.10.0
libtpu: 0.0.40
codegen_flags: <defaults>
</compile_context>

<pallas_src>
import jax
import jax.numpy as jnp
from jax.experimental import pallas as pl
from jax.experimental.pallas import tpu as pltpu


def _round_up(a: int, b: int) -> int:
    return (a + b - 1) // b * b


def additive_score_kernel(x_ref, wt_ref, uq_ref, v_ref, o_ref):
    """One tile of rows of the additive score.

    x_ref : [tm, H]  input rows (flattened batch*seq), f32 or bf16
    wt_ref: [H, H]   W^T (fc_W weight transposed -> [in, out]), same dtype as x
    uq_ref: [1, H]   precomputed fc_U(q) row, f32 (grid-invariant, hoisted)
    v_ref : [1, H]   fc_v weight as a row, f32
    o_ref : [tm, 1]  output scores for this row tile, f32
    """
    # fc_W(x): MXU matmul with f32 accumulation (bf16 or f32 operands).
    wx = jnp.dot(x_ref[...], wt_ref[...], preferred_element_type=jnp.float32)
    # tanh(Wx + Uq): VPU add (row broadcast) + EUP tanh, all f32.
    # (EUP is a separate bundle slot; hidden behind the x DMA here.)
    h = jnp.tanh(wx + uq_ref[...])
    # fc_v(.): VPU lane-multiply + XLU cross-lane reduce instead of a [H,1]
    # matmul (which would use 1 of 128/256 MXU output columns).
    s = jnp.sum(h * v_ref[...], axis=-1, keepdims=True)
    # Lane-sparse [tm,1] store: masked vst, but output bytes are ~H x smaller
    # than the x read stream, so it stays hidden.
    o_ref[...] = s.astype(o_ref.dtype)


def additive_score(x, w, u, v, q, *, tm=None):
    """x: [B, S, H]; w, u: [H, H] (PyTorch [out, in]); v: [1, H]; q: [1, H].

    The MXU compute dtype is x.dtype (no wrapper-side re-cast of x — an
    extra astype pass over x in HBM would cancel any bf16 saving). Feed x as
    bfloat16 to halve the dominant HBM stream on v6e/v7x; accumulation,
    tanh and the final reduce are always f32.

    Returns scores: [B, S] (float32), matching the PyTorch module.
    """
    B, S, H = x.shape
    M = B * S
    compute_dtype = x.dtype
    itemsize = int(jnp.dtype(compute_dtype).itemsize)

    # Row-tile selection (purely HBM-bound kernel; tile size is the lever):
    #   * target multi-MiB x tiles: 8192 rows f32 / 16384 rows bf16 at H=128
    #     -> 4 MiB per tile, 8 MiB double-buffered + 64-128 KiB W^T.  Fits
    #     v5e's 16 MiB scoped-VMEM default and v7x's 32 MiB with headroom.
    #   * keep >= 4 grid steps when M allows it, so the 'parallel' axis can
    #     shard across v7x's 2 TensorCores and double-buffering overlaps.
    #   * always a sublane (8) multiple; never taller than the (rounded) array.
    if tm is None:
        target = 16384 if itemsize <= 2 else 8192
        tm = min(target, max(256, _round_up(pl.cdiv(M, 4), 256)))
    tm = max(8, _round_up(tm, 8))
    tm = min(tm, _round_up(M, 8))
    grid = (pl.cdiv(M, tm),)   # ragged last block: OOB reads are padded
                               # (tanh keeps them finite), OOB writes masked.

    # Flatten rows only — no pad, no astype: x is read from HBM exactly once,
    # by the kernel's own pipelined DMA.
    x2d = x.reshape(M, H)
    wt = w.T.astype(compute_dtype)                                  # [H, H] (in, out), tiny
    # Hoisted, grid-invariant fc_U(q): computed once in the wrapper (f32).
    uq = jnp.dot(q.astype(jnp.float32), u.T.astype(jnp.float32))    # [1, H]
    vrow = v.astype(jnp.float32)                                    # [1, H]

    cost = pl.CostEstimate(
        flops=2 * M * H * H + 3 * M * H,
        transcendentals=M * H,
        bytes_accessed=M * H * itemsize   # x reads (dominant stream)
        + H * H * itemsize                # W^T (resident)
        + 2 * H * 4                       # uq + v rows
        + M * 4,                          # output
    )

    out = pl.pallas_call(
        additive_score_kernel,
        out_shape=jax.ShapeDtypeStruct((M, 1), jnp.float32),
        grid=grid,
        in_specs=[
            pl.BlockSpec((tm, H), lambda i: (i, 0)),   # x row tile (pipelined)
            pl.BlockSpec((H, H), lambda i: (0, 0)),    # W^T (constant block; 64 KiB at H=128,
                                                       #  double-buffer cost negligible)
            pl.BlockSpec((1, H), lambda i: (0, 0)),    # uq = fc_U(q)
            pl.BlockSpec((1, H), lambda i: (0, 0)),    # v row
        ],
        out_specs=pl.BlockSpec((tm, 1), lambda i: (i, 0)),
        compiler_params=pltpu.CompilerParams(
            dimension_semantics=("parallel",)),
        cost_estimate=cost,
    )(x2d, wt, uq, vrow)

    return out[:, 0].reshape(B, S)


def reference_additive_score(x, w, u, v, q):
    """Pure-JAX reference mirroring the PyTorch forward exactly (f32)."""
    x = x.astype(jnp.float32)
    wx = jnp.einsum("bsh,oh->bso", x, w)          # fc_W(inputs)
    uq = jnp.einsum("bqh,oh->bqo", q[None], u)    # fc_U(q_expanded), [1,1,H]
    h = jnp.tanh(wx + uq)                         # broadcast over batch & seq
    s = jnp.einsum("bsh,oh->bso", h, v)           # fc_v -> [B,S,1]
    return s[..., 0]


if __name__ == "__main__":
    # Small shapes consistent with the module (hidden_size=128).
    B, S, H = 2, 8, 128

    key = jax.random.PRNGKey(0)
    kx, kw, ku, kv, kq = jax.random.split(key, 5)

    # Deterministic "parameters" (Linear-like uniform init, no bias).
    bound = 1.0 / (H ** 0.5)
    x = jax.random.normal(kx, (B, S, H), dtype=jnp.float32)
    w = jax.random.uniform(kw, (H, H), minval=-bound, maxval=bound,
                           dtype=jnp.float32)   # fc_W.weight [out, in]
    u = jax.random.uniform(ku, (H, H), minval=-bound, maxval=bound,
                           dtype=jnp.float32)   # fc_U.weight [out, in]
    v = jax.random.uniform(kv, (1, H), minval=-bound, maxval=bound,
                           dtype=jnp.float32)   # fc_v.weight [out=1, in]
    q = jax.random.uniform(kq, (1, H), minval=-0.5, maxval=0.5,
                           dtype=jnp.float32)   # self.q

    # 1) f32 path at the small module shape (exact parity with PyTorch).
    scores = jax.block_until_ready(additive_score(x, w, u, v, q))
    ref = reference_additive_score(x, w, u, v, q)
    assert scores.shape == (B, S)
    assert jnp.allclose(scores, ref, atol=1e-5, rtol=1e-5)

    # 2) Ragged problem exercising the cdiv grid + masked last block and a
    #    multi-step 'parallel' grid (M = 1600, tm auto = 512 -> 4 steps,
    #    last block has 64 valid rows). No padding copy of x anywhere.
    B2, S2 = 16, 100
    x_big = jax.random.normal(kx, (B2, S2, H), dtype=jnp.float32)
    ref_big = reference_additive_score(x_big, w, u, v, q)
    scores_big = jax.block_until_ready(additive_score(x_big, w, u, v, q))
    assert scores_big.shape == (B2, S2)
    assert jnp.allclose(scores_big, ref_big, atol=1e-4, rtol=1e-4)

    # 3) bf16 path: x already *arrives* as bf16 (upstream producer), so the
    #    kernel's dominant HBM stream is genuinely halved; f32 accumulation.
    x_bf16 = x_big.astype(jnp.bfloat16)
    ref_bf16 = reference_additive_score(x_bf16, w, u, v, q)
    scores_bf16 = jax.block_until_ready(additive_score(x_bf16, w, u, v, q))
    assert jnp.allclose(scores_bf16, ref_bf16, atol=5e-2, rtol=5e-2)

    print("KERNEL_OK")
</pallas_src>

<mosaic_0001>
module attributes {stable_mosaic.version = 11 : i64} {
  func.func @additive_score_kernel(%arg0: i32, %arg1: memref<16x128xf32, #tpu.memory_space<vmem>>, %arg2: memref<128x128xf32, #tpu.memory_space<vmem>>, %arg3: memref<1x128xf32, #tpu.memory_space<vmem>>, %arg4: memref<1x128xf32, #tpu.memory_space<vmem>>, %arg5: memref<16x1xf32, #tpu.memory_space<vmem>>) attributes {dimension_semantics = [#tpu.dimension_semantics<parallel>], iteration_bounds = array<i64: 1>, scalar_prefetch = 0 : i64, scratch_operands = 0 : i64, tpu.core_type = #tpu.core_type<tc>, window_params = [{transform_indices = @transform_0, window_bounds = array<i64: 16, 128>}, {pipeline_mode = #tpu.pipeline_mode<synchronous>, transform_indices = @transform_1, window_bounds = array<i64: 128, 128>}, {pipeline_mode = #tpu.pipeline_mode<synchronous>, transform_indices = @transform_2, window_bounds = array<i64: 1, 128>}, {pipeline_mode = #tpu.pipeline_mode<synchronous>, transform_indices = @transform_3, window_bounds = array<i64: 1, 128>}, {transform_indices = @transform_4, window_bounds = array<i64: 16, 1>}]} {
    %c0 = arith.constant 0 : index
    %c0_0 = arith.constant 0 : index
    %0 = vector.load %arg1[%c0, %c0_0] : memref<16x128xf32, #tpu.memory_space<vmem>>, vector<16x128xf32>
    %c0_1 = arith.constant 0 : index
    %c0_2 = arith.constant 0 : index
    %1 = vector.load %arg2[%c0_1, %c0_2] : memref<128x128xf32, #tpu.memory_space<vmem>>, vector<128x128xf32>
    %cst = arith.constant dense<0.000000e+00> : vector<16x128xf32>
    %2 = tpu.matmul %0, %1, %cst {dimension_numbers = #tpu.dot_dimension_numbers<[1], [0], [0], [1], [0, 0, 1, 1], [], []>} : vector<16x128xf32>, vector<128x128xf32>, vector<16x128xf32> -> vector<16x128xf32>
    %c0_3 = arith.constant 0 : index
    %c0_4 = arith.constant 0 : index
    %3 = vector.load %arg3[%c0_3, %c0_4] : memref<1x128xf32, #tpu.memory_space<vmem>>, vector<1x128xf32>
    %4 = vector.broadcast %3 : vector<1x128xf32> to vector<16x128xf32>
    %5 = arith.addf %2, %4 : vector<16x128xf32>
    %6 = math.tanh %5 : vector<16x128xf32>
    %c0_5 = arith.constant 0 : index
    %c0_6 = arith.constant 0 : index
    %7 = vector.load %arg4[%c0_5, %c0_6] : memref<1x128xf32, #tpu.memory_space<vmem>>, vector<1x128xf32>
    %8 = vector.broadcast %7 : vector<1x128xf32> to vector<16x128xf32>
    %9 = arith.mulf %6, %8 : vector<16x128xf32>
    %cst_7 = arith.constant dense<0.000000e+00> : vector<16xf32>
    %10 = vector.multi_reduction <add>, %9, %cst_7 [1] : vector<16x128xf32> to vector<16xf32>
    %11 = vector.shape_cast %10 : vector<16xf32> to vector<16x1xf32>
    %c0_8 = arith.constant 0 : index
    %c0_9 = arith.constant 0 : index
    %12 = vector.load %arg5[%c0_8, %c0_9] : memref<16x1xf32, #tpu.memory_space<vmem>>, vector<16x1xf32>
    tpu.vector_store %arg5[%c0_8, %c0_9], %11 {strides = array<i32>} : memref<16x1xf32, #tpu.memory_space<vmem>>, vector<16x1xf32>,
    return
  }
  func.func @transform_0(%arg0: i32) -> (i32, i32) {
    %c0_i32 = arith.constant 0 : i32
    %c0_i32_0 = arith.constant 0 : i32
    return %arg0, %c0_i32 : i32, i32
  }
  func.func @transform_1(%arg0: i32) -> (i32, i32) {
    %c0_i32 = arith.constant 0 : i32
    %c0_i32_0 = arith.constant 0 : i32
    %c0_i32_1 = arith.constant 0 : i32
    return %c0_i32, %c0_i32_0 : i32, i32
  }
  func.func @transform_2(%arg0: i32) -> (i32, i32) {
    %c0_i32 = arith.constant 0 : i32
    %c0_i32_0 = arith.constant 0 : i32
    %c0_i32_1 = arith.constant 0 : i32
    return %c0_i32, %c0_i32_0 : i32, i32
  }
  func.func @transform_3(%arg0: i32) -> (i32, i32) {
    %c0_i32 = arith.constant 0 : i32
    %c0_i32_0 = arith.constant 0 : i32
    %c0_i32_1 = arith.constant 0 : i32
    return %c0_i32, %c0_i32_0 : i32, i32
  }
  func.func @transform_4(%arg0: i32) -> (i32, i32) {
    %c0_i32 = arith.constant 0 : i32
    %c0_i32_0 = arith.constant 0 : i32
    return %arg0, %c0_i32 : i32, i32
  }
}

</mosaic_0001>

<llo_original>
// kernel: tpu_custom_call.1
$region0: #{tpu_custom_call.1}
  #allocation0 [shape = 'u32[]', space=smem, size = 0x4, offset = 0x4, fixed_abs, tag = 'smem constant byte address 0x4 - core index']
  #allocation1 [shape = 'u32[144,128]{1,0:T(1,128)}', space=vmem, size = 0x12000, scoped, tag = 'internal scratch']
  %s0 = inlined_call_operand.hbm [shape: f32[16,128], index: 0, kind: input, shape index: {}]
  %s1 = inlined_call_operand.hbm [shape: f32[128,128], index: 1, kind: input, shape index: {}]
  %s2 = inlined_call_operand.vmem [shape: f32[1,128], index: 2, kind: input, shape index: {}]
  %s3 = inlined_call_operand.vmem [shape: f32[1,128], index: 3, kind: input, shape index: {}]
  %s4 = inlined_call_operand.vmem [shape: f32[16,1], index: 4, kind: output, shape index: {}]
  %s5 = sld [smem:[#allocation0]]
  $region34: #{tpu_custom_call.1} parent=0
    _
  %s7 = ssub.s32 1, %s5
  %s8 = scalar_select 0, %s7, %s5
  $region1: #{tpu_custom_call.1} parent=0
    #allocation2 [shape = 'u8[8192]{0}', space=vmem, size = 0x2000, scoped, tag = 'input window, operand 0, single buffered']
    #allocation3 [shape = 's32[1]{0}', space=sflag, size = 0x4, scoped, tag = 'scoped memory for tpu_custom_call.1']
    #allocation4 [shape = 'u8[65536]{0}', space=vmem, size = 0x10000, scoped, tag = 'input window, operand 1, single buffered']
    #allocation5 [shape = 's32[1]{0}', space=sflag, size = 0x4, scoped, tag = 'scoped memory for tpu_custom_call.1']
    %9 = vsyncpa [#allocation3], 0
    %10 = vsyncpa [#allocation5], 0
    // Predicated region
    $region2: #{tpu_custom_call.1} parent=1 // pred_check
      _
    $region3: #{tpu_custom_call.1} parent=1 // pred_check_branch
      %12 = sbr.rel (0) target = $region5
    $region4: #{tpu_custom_call.1} parent=1 // pred_region
      %s14 = ssub.s32 256, 256
      %15 = vsyncadd [#allocation3], %s14
      %s16 = sshll.u32 [#allocation2], 4
      %s17 = int_to_ptr.vmem [resolvable:$true] %s16
      %22 = dma.hbm_to_vmem [thread:$0]  %s0, 256, %s17, [#allocation3], 128, 128, 8
    $region5: #{tpu_custom_call.1} parent=1 // pred_fallthru
      _
    // Predicated region
    $region6: #{tpu_custom_call.1} parent=1 // pred_check
      _
    $region7: #{tpu_custom_call.1} parent=1 // pred_check_branch
      %24 = sbr.rel (0) target = $region9
    $region8: #{tpu_custom_call.1} parent=1 // pred_region
      %s26 = ssub.s32 2048, 2048
      %27 = vsyncadd [#allocation5], %s26
      %s28 = sshll.u32 [#allocation4], 4
      %s29 = int_to_ptr.vmem [resolvable:$true] %s28
      %34 = dma.hbm_to_vmem [thread:$0]  %s1, 2048, %s29, [#allocation5], 128, 128, 8
    $region9: #{tpu_custom_call.1} parent=1 // pred_fallthru
      _
    // Predicated region
    $region10: #{tpu_custom_call.1} parent=1 // pred_check
      _
    $region11: #{tpu_custom_call.1} parent=1 // pred_check_branch
      %36 = sbr.rel (0) target = $region13
    $region12: #{tpu_custom_call.1} parent=1 // pred_region
      _
    $region13: #{tpu_custom_call.1} parent=1 // pred_fallthru
      _
    // Predicated region
    $region14: #{tpu_custom_call.1} parent=1 // pred_check
      _
    $region15: #{tpu_custom_call.1} parent=1 // pred_check_branch
      %38 = sbr.rel (0) target = $region17
    $region16: #{tpu_custom_call.1} parent=1 // pred_region
      _
    $region17: #{tpu_custom_call.1} parent=1 // pred_fallthru
      _
    // Predicated region
    $region18: #{tpu_custom_call.1} parent=1 // pred_check
      _
    $region19: #{tpu_custom_call.1} parent=1 // pred_check_branch
      %40 = sbr.rel (0) target = $region21
    $region20: #{tpu_custom_call.1} parent=1 // pred_region
      %41 = dma.done [#allocation3], 256
    $region21: #{tpu_custom_call.1} parent=1 // pred_fallthru
      _
    // Predicated region
    $region22: #{tpu_custom_call.1} parent=1 // pred_check
      _
    $region23: #{tpu_custom_call.1} parent=1 // pred_check_branch
      %43 = sbr.rel (0) target = $region25
    $region24: #{tpu_custom_call.1} parent=1 // pred_region
      %44 = dma.done [#allocation5], 2048
    $region25: #{tpu_custom_call.1} parent=1 // pred_fallthru
      _
    %v45 = vld [vmem:[#allocation2] sm:$0xff]
    %v46 = vld [vmem:[#allocation2 + $0x8] sm:$0xff]
    %v47 = vld [vmem:[#allocation4] sm:$0xff]
    %v48 = vld [vmem:[#allocation4 + $0x8] sm:$0xff]
    %v49 = vld [vmem:[#allocation4 + $0x10] sm:$0xff]
    %v50 = vld [vmem:[#allocation4 + $0x18] sm:$0xff]
    %v51 = vld [vmem:[#allocation4 + $0x20] sm:$0xff]
    %v52 = vld [vmem:[#allocation4 + $0x28] sm:$0xff]
    %v53 = vld [vmem:[#allocation4 + $0x30] sm:$0xff]
    %v54 = vld [vmem:[#allocation4 + $0x38] sm:$0xff]
    %v55 = vld [vmem:[#allocation4 + $0x40] sm:$0xff]
    %v56 = vld [vmem:[#allocation4 + $0x48] sm:$0xff]
    %v57 = vld [vmem:[#allocation4 + $0x50] sm:$0xff]
    %v58 = vld [vmem:[#allocation4 + $0x58] sm:$0xff]
    %v59 = vld [vmem:[#allocation4 + $0x60] sm:$0xff]
    %v60 = vld [vmem:[#allocation4 + $0x68] sm:$0xff]
    %v61 = vld [vmem:[#allocation4 + $0x70] sm:$0xff]
    %v62 = vld [vmem:[#allocation4 + $0x78] sm:$0xff]
    %v63 = vld [vmem:[%s2] sm:$0x1]
    %v65 = vlaneseq
    %v66 = vshrl.u32 %v65, 7
    %v67 = vsub.s32 0, %v66
    %v68 = vrot.slane %v63, %v67
    %70 = vmatprep.subr.mxu0 0.0
    %71 = vmatpush1.msra.mxu0 %v47
    %72 = vmatprep.subr.mxu0 0.0
    %73 = vmatpush1.msra.mxu0 %v48
    %74 = vmatprep.subr.mxu0 0.0
    %75 = vmatpush1.msra.mxu0 %v49
    %76 = vmatprep.subr.mxu0 0.0
    %77 = vmatpush1.msra.mxu0 %v50
    %78 = vmatprep.subr.mxu0 0.0
    %79 = vmatpush1.msra.mxu0 %v51
    %80 = vmatprep.subr.mxu0 0.0
    %81 = vmatpush1.msra.mxu0 %v52
    %82 = vmatprep.subr.mxu0 0.0
    %83 = vmatpush1.msra.mxu0 %v53
    %84 = vmatprep.subr.mxu0 0.0
    %85 = vmatpush1.msra.mxu0 %v54
    %86 = vmatprep.subr.mxu0 0.0
    %87 = vmatpush1.msra.mxu0 %v55
    %88 = vmatprep.subr.mxu0 0.0
    %89 = vmatpush1.msra.mxu0 %v56
    %90 = vmatprep.subr.mxu0 0.0
    %91 = vmatpush1.msra.mxu0 %v57
    %92 = vmatprep.subr.mxu0 0.0
    %93 = vmatpush1.msra.mxu0 %v58
    %94 = vmatprep.subr.mxu0 0.0
    %95 = vmatpush1.msra.mxu0 %v59
    %96 = vmatprep.subr.mxu0 0.0
    %97 = vmatpush1.msra.mxu0 %v60
    %98 = vmatprep.subr.mxu0 0.0
    %99 = vmatpush1.msra.mxu0 %v61
    %100 = vmatprep.subr.mxu0 0.0
    %101 = vmatpush1.msra.mxu0 %v62
    %102 = vmatprep.subr.mxu0 0.0
    %103 = vmatpush1.msra.mxu0 0.0
    %104 = vmatprep.subr.mxu0 0.0
    %105 = vmatpush1.msra.mxu0 0.0
    %106 = vmatprep.subr.mxu0 0.0
    %107 = vmatpush1.msra.mxu0 0.0
    %108 = vmatprep.subr.mxu0 0.0
    %109 = vmatpush1.msra.mxu0 0.0
    %110 = vmatprep.subr.mxu0 0.0
    %111 = vmatpush1.msra.mxu0 0.0
    %112 = vmatprep.subr.mxu0 0.0
    %113 = vmatpush1.msra.mxu0 0.0
    %114 = vmatprep.subr.mxu0 0.0
    %115 = vmatpush1.msra.mxu0 0.0
    %116 = vmatprep.subr.mxu0 0.0
    %117 = vmatpush1.msra.mxu0 0.0
    %118 = vmatprep.subr.mxu0 0.0
    %119 = vmatpush1.msra.mxu0 0.0
    %120 = vmatprep.subr.mxu0 0.0
    %121 = vmatpush1.msra.mxu0 0.0
    %122 = vmatprep.subr.mxu0 0.0
    %123 = vmatpush1.msra.mxu0 0.0
    %124 = vmatprep.subr.mxu0 0.0
    %125 = vmatpush1.msra.mxu0 0.0
    %126 = vmatprep.subr.mxu0 0.0
    %127 = vmatpush1.msra.mxu0 0.0
    %128 = vmatprep.subr.mxu0 0.0
    %129 = vmatpush1.msra.mxu0 0.0
    %130 = vmatprep.subr.mxu0 0.0
    %131 = vmatpush1.msra.mxu0 0.0
    %132 = vmatprep.subr.mxu0 0.0
    %133 = vmatpush1.msra.mxu0 0.0
    %134 = vmatprep.mubr.f32.mxu0 0.0
    %135 = vmatmul.mubr.f32.gmra.mrb[0].mxu0 %v45
    %v136 = vpop.f32.mrb[0].mxu0
    %v137 = vadd.f32 %v68, %v136
    %v138 = vpop.f32.mrb[0].mxu0
    %139 = vmatprep.mubr.f32.mxu0 0.0
    %140 = vmatmul.mubr.f32.gmra.mrb[0].mxu0 %v46
    %v141 = vpop.f32.mrb[0].mxu0
    %v142 = vadd.f32 %v68, %v141
    %v143 = vpop.f32.mrb[0].mxu0
    %144 = vdwg.mxu0
    %v145 = vtanh.pop %v137
    %v146 = vtanh.pop %v142
    %v147 = vld [vmem:[%s3] sm:$0x1]
    %v149 = vlaneseq
    %v150 = vshrl.u32 %v149, 7
    %v151 = vsub.s32 0, %v150
    %v152 = vrot.slane %v147, %v151
    %v154 = vmul.f32 %v145, %v152
    %v155 = vmul.f32 %v146, %v152
    %156 = vadd.xlane.f32.xlu0 %v154
    %v157 = vpop.xlane.xlu0 %156
    %158 = vadd.xlane.f32.xlu0 %v155
    %v159 = vpop.xlane.xlu0 %158
    %vm160 = vcmask 7168
    %161 = vst.msk [vmem:[%s4] sm:$0xff] %vm160, %v157
    %162 = vst.msk [vmem:[%s4 + $0x8] sm:$0xff] %vm160, %v159
    // Predicated region
    $region26: #{tpu_custom_call.1} parent=1 // pred_check
      _
    $region27: #{tpu_custom_call.1} parent=1 // pred_check_branch
      %164 = sbr.rel (0) target = $region29
    $region28: #{tpu_custom_call.1} parent=1 // pred_region
      _
    $region29: #{tpu_custom_call.1} parent=1 // pred_fallthru
      _
    // Predicated region
    $region30: #{tpu_custom_call.1} parent=1 // pred_check
      _
    $region31: #{tpu_custom_call.1} parent=1 // pred_check_branch
      %166 = sbr.rel (0) target = $region33
    $region32: #{tpu_custom_call.1} parent=1 // pred_region
      _
    $region33: #{tpu_custom_call.1} parent=1 // pred_fallthru
      _
    %167 = vsyncpa [#allocation3], 1
    %168 = vsyncpa [#allocation5], 1

</llo_original>
